<compile_context>
chip_gen: v5e
topology: v5e:2x2
jax: 0.10.0
libtpu: 0.0.40
codegen_flags: <defaults>
</compile_context>

<pallas_src>
import numpy as np
import jax
import jax.numpy as jnp
from jax.experimental import pallas as pl
from jax.experimental.pallas import tpu as pltpu


def _interp_matrix(w_in: int, w_out: int) -> np.ndarray:
    """Bilinear (align_corners=False, half-pixel) width-resize as a matrix.

    Returns A of shape (w_out, w_in) with out[j] = sum_k A[j, k] * in[k],
    matching PyTorch F.interpolate(mode='bilinear') along the width axis
    (height is size-1 -> pure broadcast, handled by folding 1/H_h below).
    """
    j = np.arange(w_out)
    src = np.maximum((j + 0.5) * (w_in / w_out) - 0.5, 0.0)
    x0 = np.minimum(np.floor(src).astype(np.int64), w_in - 1)
    x1 = np.minimum(x0 + 1, w_in - 1)
    w_hi = (src - x0).astype(np.float32)
    w_lo = (1.0 - w_hi).astype(np.float32)
    A = np.zeros((w_out, w_in), dtype=np.float32)
    np.add.at(A, (j, x0), w_lo)
    np.add.at(A, (j, x1), w_hi)
    return A


def _replication_matrix(W: int, H: int) -> np.ndarray:
    """T of shape (W, H*W) with T[w', h*W + w] = (w' == w).

    gate_flat = gate @ T replicates a (·, W) gate across H in the flattened
    h*W + w layout, on the MXU instead of a cross-lane tile.
    """
    return np.tile(np.eye(W, dtype=np.float32), (1, H))


def _r_func_kernel(sig_ref, h_ref, l_ref, a_ref, w1_ref, bnb_ref, w2_ref,
                   b2_ref, t_ref, o_ref):
    # Fused AdaptiveAvgPool2d((1,None)) + bilinear width-resize for the whole
    # batch tile: one (b_tile*C_in, H_h*W_h) @ (H_h*W_h, W) matmul
    # (the 1/H_h mean is folded into a_ref).
    m = jnp.dot(h_ref[...], a_ref[...], preferred_element_type=jnp.float32)

    # dcov: 1x1 conv with BatchNorm(eval) scale folded into a block-diagonal
    # weight (one matmul for the whole tile), additive shift, ReLU6.
    y1 = jnp.dot(w1_ref[...], m.astype(w1_ref.dtype),
                 preferred_element_type=jnp.float32)
    y1 = jnp.clip(y1 + bnb_ref[...], 0.0, 6.0)

    # conv_h: block-diagonal 1x1 conv + bias, sigmoid gate (still W lanes).
    y2 = jnp.dot(w2_ref[...], y1.astype(w2_ref.dtype),
                 preferred_element_type=jnp.float32)
    gate = jax.nn.sigmoid(y2 + b2_ref[...])                 # (bt*C_out, W)

    # Fold the per-batch scalar while the gate is narrow, then broadcast
    # across H via the precomputed 0/1 replication matrix on the idle MXU.
    sgate = sig_ref[...] * gate                             # (bt*C_out, W)
    gate_flat = jnp.dot(sgate.astype(t_ref.dtype), t_ref[...],
                        preferred_element_type=jnp.float32)  # (bt*C_out, H*W)

    # out = l_x + sig * (l_x * gate) = l_x * (1 + sig * gate)
    if o_ref.dtype == jnp.float32:
        o_ref[...] = l_ref[...].astype(jnp.float32) * (1.0 + gate_flat)
    else:
        # keep the dominant elementwise stream in the storage dtype
        # (bf16 VALU on v6e/v7x; on v5e the compiler upcasts as needed).
        o_ref[...] = l_ref[...] * (1.0 + gate_flat).astype(o_ref.dtype)


def _pick_b_tile(B, C_in, C_mid, C_out, HW_h, HW, W, l_bytes, mxu_bytes):
    """Largest batch tile that fits a per-step VMEM byte budget."""
    def step_bytes(d):
        stream = (d * C_in * HW_h * mxu_bytes          # h block
                  + 2 * d * C_out * HW * l_bytes       # l in + out block
                  + d * C_out * 4)                     # sig column
        consts = ((HW_h * W                            # pool+interp matrix
                   + d * C_mid * d * C_in              # block-diag dcov
                   + d * C_out * d * C_mid             # block-diag conv_h
                   + W * HW) * mxu_bytes               # replication matrix
                  + (d * C_mid + d * C_out) * W * 4)   # pre-broadcast shifts
        return 2 * (stream + consts)                   # double-buffered

    budget = 8 << 20   # fits v5e's 16 MiB scoped default, safe on v7x VMEM
    divs = [d for d in range(1, B + 1) if B % d == 0]
    fit = [d for d in divs if step_bytes(d) <= budget and d <= 16]
    b_tile = max(fit) if fit else 1
    # Prefer grid depth >= 4 (v7x: 2 TCs x >= 2 pipelined steps each) only
    # when each step still streams a reasonable l-block (>= 256 KiB);
    # otherwise (small B / tiny blocks) one big step avoids per-step overhead.
    deep = [d for d in fit
            if B // d >= 4 and d * C_out * HW * l_bytes >= (256 << 10)]
    if deep:
        b_tile = max(deep)
    return b_tile, step_bytes(b_tile)


def r_func_forward(h_x, l_x, sig, w1, b1, gamma, beta, mean, var, w2, b2,
                   eps=1e-5, b_tile=None, mxu_dtype=None, donate_lx=False):
    B, C_in, H_h, W_h = h_x.shape
    _, C_out, H, W = l_x.shape
    C_mid = w1.shape[0]
    HW_h = H_h * W_h
    HW = H * W

    # bf16 MXU inputs when the activations are already bf16 (v6e/v7x native);
    # keep f32 otherwise so results match an f32 reference tightly.
    if mxu_dtype is None:
        mxu_dtype = (jnp.bfloat16
                     if jnp.dtype(l_x.dtype) == jnp.dtype(jnp.bfloat16)
                     else jnp.float32)
    mxu_bytes = jnp.dtype(mxu_dtype).itemsize
    l_bytes = jnp.dtype(l_x.dtype).itemsize

    if b_tile is None:
        b_tile, step_bytes = _pick_b_tile(B, C_in, C_mid, C_out, HW_h, HW, W,
                                          l_bytes, mxu_bytes)
    else:
        assert B % b_tile == 0, "b_tile must divide the batch size"
        _, step_bytes = _pick_b_tile(1, C_in, C_mid, C_out, HW_h, HW, W,
                                     l_bytes, mxu_bytes)
        step_bytes *= b_tile
    vmem_limit = int(min(64 << 20, max(32 << 20, 2 * step_bytes)))

    # Fold mean-over-H and bilinear width-resize into one (H_h*W_h, W) matrix.
    A = _interp_matrix(W_h, W)                                       # (W, W_h)
    a2 = jnp.asarray(np.tile(A.T / float(H_h), (H_h, 1)), mxu_dtype)  # (HW_h, W)

    # Fold conv bias + BatchNorm(eval, running stats) into weights + shift.
    # TODO(synk): training-mode BatchNorm (batch statistics) is not modeled.
    bn_scale = gamma / jnp.sqrt(var + eps)
    bn_shift = beta + bn_scale * (b1 - mean)
    w1f = (bn_scale[:, None] * w1).astype(jnp.float32)               # (C_mid, C_in)

    # Block-diagonal weights so the whole batch tile is 3 matmuls total.
    eye = jnp.eye(b_tile, dtype=jnp.float32)
    w1_bd = jnp.kron(eye, w1f).astype(mxu_dtype)          # (bt*C_mid, bt*C_in)
    w2_bd = jnp.kron(eye, w2.astype(jnp.float32)).astype(mxu_dtype)
    bnb = jnp.tile(jnp.broadcast_to(bn_shift.astype(jnp.float32)[:, None],
                                    (C_mid, W)), (b_tile, 1))        # (bt*C_mid, W)
    b2b = jnp.tile(jnp.broadcast_to(b2.astype(jnp.float32)[:, None],
                                    (C_out, W)), (b_tile, 1))        # (bt*C_out, W)
    T = jnp.asarray(_replication_matrix(W, H), mxu_dtype)            # (W, HW)

    # Lane-dense flattening (free row-major reshapes for NCHW) with the batch
    # merged onto the sublane axis.
    h2 = h_x.reshape(B * C_in, HW_h).astype(mxu_dtype)
    l2 = l_x.reshape(B * C_out, HW)
    sig_col = jnp.broadcast_to(sig.astype(jnp.float32)[:, None, None],
                               (B, C_out, 1)).reshape(B * C_out, 1)

    blk = lambda t: (t, 0)
    full = lambda t: (0, 0)

    out = pl.pallas_call(
        _r_func_kernel,
        out_shape=jax.ShapeDtypeStruct((B * C_out, HW), l_x.dtype),
        grid=(B // b_tile,),
        in_specs=[
            pl.BlockSpec((b_tile * C_out, 1), blk),                   # sig column
            pl.BlockSpec((b_tile * C_in, HW_h), blk),                 # h_x flat
            pl.BlockSpec((b_tile * C_out, HW), blk),                  # l_x flat
            pl.BlockSpec((HW_h, W), full),                            # pool+interp
            pl.BlockSpec((b_tile * C_mid, b_tile * C_in), full),      # dcov (blkdiag)
            pl.BlockSpec((b_tile * C_mid, W), full),                  # BN shift
            pl.BlockSpec((b_tile * C_out, b_tile * C_mid), full),     # conv_h (blkdiag)
            pl.BlockSpec((b_tile * C_out, W), full),                  # conv_h bias
            pl.BlockSpec((W, HW), full),                              # H replication
        ],
        out_specs=pl.BlockSpec((b_tile * C_out, HW), blk),
        compiler_params=pltpu.CompilerParams(
            dimension_semantics=("parallel",),
            vmem_limit_bytes=vmem_limit),
        input_output_aliases=({2: 0} if donate_lx else {}),
    )(sig_col, h2, l2, a2, w1_bd, bnb, w2_bd, b2b, T)

    return out.reshape(B, C_out, H, W)


def r_func_ref(h_x, l_x, sig, w1, b1, gamma, beta, mean, var, w2, b2, eps=1e-5):
    """Pure-JAX reference (same math, no Pallas)."""
    B, C_out, H, W = l_x.shape
    W_h = h_x.shape[3]
    A = jnp.asarray(_interp_matrix(W_h, W))                  # (W, W_h)
    pooled = jnp.mean(h_x, axis=2)                           # (B, C_in, W_h)
    m = jnp.einsum('bck,jk->bcj', pooled, A)                 # (B, C_in, W)
    bn_scale = gamma / jnp.sqrt(var + eps)
    bn_shift = beta + bn_scale * (b1 - mean)
    y1 = jnp.einsum('mc,bcw->bmw', w1, m)
    y1 = y1 * bn_scale[None, :, None] + bn_shift[None, :, None]
    y1 = jnp.clip(y1, 0.0, 6.0)
    y2 = jnp.einsum('om,bmw->bow', w2, y1) + b2[None, :, None]
    gate = jax.nn.sigmoid(y2)                                # (B, C_out, W)
    return l_x * (1.0 + sig[:, None, None, None] * gate[:, :, None, :])


if __name__ == "__main__":
    key = jax.random.PRNGKey(0)
    ks = jax.random.split(key, 11)

    # Small shapes consistent with the module: int_c=8, out_c=32, reduction=4.
    B, int_c, out_c, reduction = 4, 8, 32, 4
    C_mid = out_c // reduction
    H_h, W_h = 16, 8        # h_x spatial
    H, W = 16, 16           # l_x spatial (width resize 8 -> 16 exercised)

    h_x = jax.random.normal(ks[0], (B, int_c, H_h, W_h), jnp.float32)
    l_x = jax.random.normal(ks[1], (B, out_c, H, W), jnp.float32)
    sig = jax.random.normal(ks[2], (B,), jnp.float32)

    # deterministic synthetic parameters (shapes from the module __init__)
    w1 = 0.1 * jax.random.normal(ks[3], (C_mid, int_c), jnp.float32)   # dcov 1x1
    b1 = 0.1 * jax.random.normal(ks[4], (C_mid,), jnp.float32)
    gamma = 1.0 + 0.1 * jax.random.normal(ks[5], (C_mid,), jnp.float32)
    beta = 0.1 * jax.random.normal(ks[6], (C_mid,), jnp.float32)
    mean = 0.1 * jax.random.normal(ks[7], (C_mid,), jnp.float32)
    var = jnp.abs(jax.random.normal(ks[8], (C_mid,), jnp.float32)) + 0.5
    w2 = 0.1 * jax.random.normal(ks[9], (out_c, C_mid), jnp.float32)   # conv_h 1x1
    b2 = 0.1 * jax.random.normal(ks[10], (out_c,), jnp.float32)

    ref = r_func_ref(h_x, l_x, sig, w1, b1, gamma, beta, mean, var, w2, b2)

    # Auto b_tile (single big step at these tiny shapes).
    out = r_func_forward(h_x, l_x, sig, w1, b1, gamma, beta, mean, var, w2, b2)
    out = jax.block_until_ready(out)
    assert out.shape == l_x.shape and out.dtype == l_x.dtype
    assert jnp.allclose(out, ref, atol=1e-4, rtol=1e-4), "mismatch (auto b_tile)"

    # Forced smaller tile to exercise the multi-step ("parallel") grid path.
    out2 = r_func_forward(h_x, l_x, sig, w1, b1, gamma, beta, mean, var, w2,
                          b2, b_tile=2)
    out2 = jax.block_until_ready(out2)
    assert jnp.allclose(out2, ref, atol=1e-4, rtol=1e-4), "mismatch (b_tile=2)"

    print("KERNEL_OK")
</pallas_src>

<mosaic_0001>
module attributes {stable_mosaic.version = 11 : i64} {
  func.func @_r_func_kernel(%arg0: i32, %arg1: memref<128x1xf32, #tpu.memory_space<vmem>>, %arg2: memref<32x128xf32, #tpu.memory_space<vmem>>, %arg3: memref<128x256xf32, #tpu.memory_space<vmem>>, %arg4: memref<128x16xf32, #tpu.memory_space<vmem>>, %arg5: memref<32x32xf32, #tpu.memory_space<vmem>>, %arg6: memref<32x16xf32, #tpu.memory_space<vmem>>, %arg7: memref<128x32xf32, #tpu.memory_space<vmem>>, %arg8: memref<128x16xf32, #tpu.memory_space<vmem>>, %arg9: memref<16x256xf32, #tpu.memory_space<vmem>>, %arg10: memref<128x256xf32, #tpu.memory_space<vmem>>) attributes {dimension_semantics = [#tpu.dimension_semantics<parallel>], iteration_bounds = array<i64: 1>, scalar_prefetch = 0 : i64, scratch_operands = 0 : i64, tpu.core_type = #tpu.core_type<tc>, window_params = [{transform_indices = @transform_0, window_bounds = array<i64: 128, 1>}, {transform_indices = @transform_1, window_bounds = array<i64: 32, 128>}, {transform_indices = @transform_2, window_bounds = array<i64: 128, 256>}, {pipeline_mode = #tpu.pipeline_mode<synchronous>, transform_indices = @transform_3, window_bounds = array<i64: 128, 16>}, {pipeline_mode = #tpu.pipeline_mode<synchronous>, transform_indices = @transform_4, window_bounds = array<i64: 32, 32>}, {pipeline_mode = #tpu.pipeline_mode<synchronous>, transform_indices = @transform_5, window_bounds = array<i64: 32, 16>}, {pipeline_mode = #tpu.pipeline_mode<synchronous>, transform_indices = @transform_6, window_bounds = array<i64: 128, 32>}, {pipeline_mode = #tpu.pipeline_mode<synchronous>, transform_indices = @transform_7, window_bounds = array<i64: 128, 16>}, {pipeline_mode = #tpu.pipeline_mode<synchronous>, transform_indices = @transform_8, window_bounds = array<i64: 16, 256>}, {transform_indices = @transform_9, window_bounds = array<i64: 128, 256>}]} {
    %c0 = arith.constant 0 : index
    %c0_0 = arith.constant 0 : index
    %0 = vector.load %arg2[%c0, %c0_0] : memref<32x128xf32, #tpu.memory_space<vmem>>, vector<32x128xf32>
    %c0_1 = arith.constant 0 : index
    %c0_2 = arith.constant 0 : index
    %1 = vector.load %arg4[%c0_1, %c0_2] : memref<128x16xf32, #tpu.memory_space<vmem>>, vector<128x16xf32>
    %cst = arith.constant dense<0.000000e+00> : vector<32x16xf32>
    %2 = tpu.matmul %0, %1, %cst {dimension_numbers = #tpu.dot_dimension_numbers<[1], [0], [0], [1], [0, 0, 1, 1], [], []>} : vector<32x128xf32>, vector<128x16xf32>, vector<32x16xf32> -> vector<32x16xf32>
    %c0_3 = arith.constant 0 : index
    %c0_4 = arith.constant 0 : index
    %3 = vector.load %arg5[%c0_3, %c0_4] : memref<32x32xf32, #tpu.memory_space<vmem>>, vector<32x32xf32>
    %cst_5 = arith.constant dense<0.000000e+00> : vector<32x16xf32>
    %4 = tpu.matmul %3, %2, %cst_5 {dimension_numbers = #tpu.dot_dimension_numbers<[1], [0], [0], [1], [0, 0, 1, 1], [], []>} : vector<32x32xf32>, vector<32x16xf32>, vector<32x16xf32> -> vector<32x16xf32>
    %c0_6 = arith.constant 0 : index
    %c0_7 = arith.constant 0 : index
    %5 = vector.load %arg6[%c0_6, %c0_7] : memref<32x16xf32, #tpu.memory_space<vmem>>, vector<32x16xf32>
    %6 = arith.addf %4, %5 : vector<32x16xf32>
    %cst_8 = arith.constant 0.000000e+00 : f32
    %cst_9 = arith.constant 6.000000e+00 : f32
    %7 = vector.broadcast %cst_8 : f32 to vector<32x16xf32>
    %8 = arith.maximumf %7, %6 : vector<32x16xf32>
    %9 = vector.broadcast %cst_9 : f32 to vector<32x16xf32>
    %10 = arith.minimumf %9, %8 : vector<32x16xf32>
    %c0_10 = arith.constant 0 : index
    %c0_11 = arith.constant 0 : index
    %11 = vector.load %arg7[%c0_10, %c0_11] : memref<128x32xf32, #tpu.memory_space<vmem>>, vector<128x32xf32>
    %cst_12 = arith.constant dense<0.000000e+00> : vector<128x16xf32>
    %12 = tpu.matmul %11, %10, %cst_12 {dimension_numbers = #tpu.dot_dimension_numbers<[1], [0], [0], [1], [0, 0, 1, 1], [], []>} : vector<128x32xf32>, vector<32x16xf32>, vector<128x16xf32> -> vector<128x16xf32>
    %c0_13 = arith.constant 0 : index
    %c0_14 = arith.constant 0 : index
    %13 = vector.load %arg8[%c0_13, %c0_14] : memref<128x16xf32, #tpu.memory_space<vmem>>, vector<128x16xf32>
    %14 = arith.addf %12, %13 : vector<128x16xf32>
    %15 = arith.negf %14 : vector<128x16xf32>
    %16 = math.exp %15 : vector<128x16xf32>
    %cst_15 = arith.constant 1.000000e+00 : f32
    %17 = vector.broadcast %cst_15 : f32 to vector<128x16xf32>
    %18 = arith.addf %17, %16 : vector<128x16xf32>
    %19 = arith.divf %17, %18 : vector<128x16xf32>
    %c0_16 = arith.constant 0 : index
    %c0_17 = arith.constant 0 : index
    %20 = vector.load %arg1[%c0_16, %c0_17] : memref<128x1xf32, #tpu.memory_space<vmem>>, vector<128x1xf32>
    %21 = vector.broadcast %20 : vector<128x1xf32> to vector<128x16xf32>
    %22 = arith.mulf %21, %19 : vector<128x16xf32>
    %c0_18 = arith.constant 0 : index
    %c0_19 = arith.constant 0 : index
    %23 = vector.load %arg9[%c0_18, %c0_19] : memref<16x256xf32, #tpu.memory_space<vmem>>, vector<16x256xf32>
    %cst_20 = arith.constant dense<0.000000e+00> : vector<128x256xf32>
    %24 = tpu.matmul %22, %23, %cst_20 {dimension_numbers = #tpu.dot_dimension_numbers<[1], [0], [0], [1], [0, 0, 1, 1], [], []>} : vector<128x16xf32>, vector<16x256xf32>, vector<128x256xf32> -> vector<128x256xf32>
    %c0_21 = arith.constant 0 : index
    %c0_22 = arith.constant 0 : index
    %25 = vector.load %arg3[%c0_21, %c0_22] : memref<128x256xf32, #tpu.memory_space<vmem>>, vector<128x256xf32>
    %cst_23 = arith.constant 1.000000e+00 : f32
    %26 = vector.broadcast %cst_23 : f32 to vector<128x256xf32>
    %27 = arith.addf %26, %24 : vector<128x256xf32>
    %28 = arith.mulf %25, %27 : vector<128x256xf32>
    %c0_24 = arith.constant 0 : index
    %c0_25 = arith.constant 0 : index
    %29 = vector.load %arg10[%c0_24, %c0_25] : memref<128x256xf32, #tpu.memory_space<vmem>>, vector<128x256xf32>
    tpu.vector_store %arg10[%c0_24, %c0_25], %28 {strides = array<i32>} : memref<128x256xf32, #tpu.memory_space<vmem>>, vector<128x256xf32>,
    return
  }
  func.func @transform_0(%arg0: i32) -> (i32, i32) {
    %c0_i32 = arith.constant 0 : i32
    %c0_i32_0 = arith.constant 0 : i32
    return %arg0, %c0_i32 : i32, i32
  }
  func.func @transform_1(%arg0: i32) -> (i32, i32) {
    %c0_i32 = arith.constant 0 : i32
    %c0_i32_0 = arith.constant 0 : i32
    return %arg0, %c0_i32 : i32, i32
  }
  func.func @transform_2(%arg0: i32) -> (i32, i32) {
    %c0_i32 = arith.constant 0 : i32
    %c0_i32_0 = arith.constant 0 : i32
    return %arg0, %c0_i32 : i32, i32
  }
  func.func @transform_3(%arg0: i32) -> (i32, i32) {
    %c0_i32 = arith.constant 0 : i32
    %c0_i32_0 = arith.constant 0 : i32
    %c0_i32_1 = arith.constant 0 : i32
    return %c0_i32, %c0_i32_0 : i32, i32
  }
  func.func @transform_4(%arg0: i32) -> (i32, i32) {
    %c0_i32 = arith.constant 0 : i32
    %c0_i32_0 = arith.constant 0 : i32
    %c0_i32_1 = arith.constant 0 : i32
    return %c0_i32, %c0_i32_0 : i32, i32
  }
  func.func @transform_5(%arg0: i32) -> (i32, i32) {
    %c0_i32 = arith.constant 0 : i32
    %c0_i32_0 = arith.constant 0 : i32
    %c0_i32_1 = arith.constant 0 : i32
    return %c0_i32, %c0_i32_0 : i32, i32
  }
  func.func @transform_6(%arg0: i32) -> (i32, i32) {
    %c0_i32 = arith.constant 0 : i32
    %c0_i32_0 = arith.constant 0 : i32
    %c0_i32_1 = arith.constant 0 : i32
    return %c0_i32, %c0_i32_0 : i32, i32
  }
  func.func @transform_7(%arg0: i32) -> (i32, i32) {
    %c0_i32 = arith.constant 0 : i32
    %c0_i32_0 = arith.constant 0 : i32
    %c0_i32_1 = arith.constant 0 : i32
    return %c0_i32, %c0_i32_0 : i32, i32
  }
  func.func @transform_8(%arg0: i32) -> (i32, i32) {
    %c0_i32 = arith.constant 0 : i32
    %c0_i32_0 = arith.constant 0 : i32
    %c0_i32_1 = arith.constant 0 : i32
    return %c0_i32, %c0_i32_0 : i32, i32
  }
  func.func @transform_9(%arg0: i32) -> (i32, i32) {
    %c0_i32 = arith.constant 0 : i32
    %c0_i32_0 = arith.constant 0 : i32
    return %arg0, %c0_i32 : i32, i32
  }
}

</mosaic_0001>

<llo_original>
// kernel: tpu_custom_call.1
$region0: #{tpu_custom_call.1}
  #allocation0 [shape = 'u32[]', space=smem, size = 0x4, offset = 0x4, fixed_abs, tag = 'smem constant byte address 0x4 - core index']
  #allocation1 [shape = 'u32[72,128]{1,0:T(1,128)}', space=vmem, size = 0x9000, scoped, tag = 'internal scratch']
  %s0 = inlined_call_operand.vmem [shape: f32[128,1], index: 0, kind: input, shape index: {}]
  %s1 = inlined_call_operand.vmem [shape: f32[32,128], index: 1, kind: input, shape index: {}]
  %s2 = inlined_call_operand.vmem [shape: f32[128,256], index: 2, kind: input, shape index: {}]
  %s3 = inlined_call_operand.vmem [shape: f32[128,16], index: 3, kind: input, shape index: {}]
  %s4 = inlined_call_operand.vmem [shape: f32[32,32], index: 4, kind: input, shape index: {}]
  %s5 = inlined_call_operand.vmem [shape: f32[32,16], index: 5, kind: input, shape index: {}]
  %s6 = inlined_call_operand.vmem [shape: f32[128,32], index: 6, kind: input, shape index: {}]
  %s7 = inlined_call_operand.vmem [shape: f32[128,16], index: 7, kind: input, shape index: {}]
  %s8 = inlined_call_operand.vmem [shape: f32[16,256], index: 8, kind: input, shape index: {}]
  %s9 = inlined_call_operand.hbm [shape: f32[128,256], index: 9, kind: output, shape index: {}]
  %s10 = sld [smem:[#allocation0]]
  $region46: #{tpu_custom_call.1} parent=0
    _
  %s12 = ssub.s32 1, %s10
  %s13 = scalar_select 0, %s12, %s10
  $region1: #{tpu_custom_call.1} parent=0
    #allocation2 [shape = 'u8[131072]{0}', space=vmem, size = 0x20000, scoped, tag = 'output window, operand 0, single buffered']
    #allocation3 [shape = 's32[1]{0}', space=sflag, size = 0x4, scoped, tag = 'scoped memory for tpu_custom_call.1']
    %14 = vsyncpa [#allocation3], 0
    // Predicated region
    $region2: #{tpu_custom_call.1} parent=1 // pred_check
      _
    $region3: #{tpu_custom_call.1} parent=1 // pred_check_branch
      %16 = sbr.rel (0) target = $region5
    $region4: #{tpu_custom_call.1} parent=1 // pred_region
      _
    $region5: #{tpu_custom_call.1} parent=1 // pred_fallthru
      _
    // Predicated region
    $region6: #{tpu_custom_call.1} parent=1 // pred_check
      _
    $region7: #{tpu_custom_call.1} parent=1 // pred_check_branch
      %18 = sbr.rel (0) target = $region9
    $region8: #{tpu_custom_call.1} parent=1 // pred_region
      _
    $region9: #{tpu_custom_call.1} parent=1 // pred_fallthru
      _
    // Predicated region
    $region10: #{tpu_custom_call.1} parent=1 // pred_check
      _
    $region11: #{tpu_custom_call.1} parent=1 // pred_check_branch
      %20 = sbr.rel (0) target = $region13
    $region12: #{tpu_custom_call.1} parent=1 // pred_region
      _
    $region13: #{tpu_custom_call.1} parent=1 // pred_fallthru
      _
    // Predicated region
    $region14: #{tpu_custom_call.1} parent=1 // pred_check
      _
    $region15: #{tpu_custom_call.1} parent=1 // pred_check_branch
      %22 = sbr.rel (0) target = $region17
    $region16: #{tpu_custom_call.1} parent=1 // pred_region
      _
    $region17: #{tpu_custom_call.1} parent=1 // pred_fallthru
      _
    // Predicated region
    $region18: #{tpu_custom_call.1} parent=1 // pred_check
      _
    $region19: #{tpu_custom_call.1} parent=1 // pred_check_branch
      %24 = sbr.rel (0) target = $region21
    $region20: #{tpu_custom_call.1} parent=1 // pred_region
      _
    $region21: #{tpu_custom_call.1} parent=1 // pred_fallthru
      _
    // Predicated region
    $region22: #{tpu_custom_call.1} parent=1 // pred_check
      _
    $region23: #{tpu_custom_call.1} parent=1 // pred_check_branch
      %26 = sbr.rel (0) target = $region25
    $region24: #{tpu_custom_call.1} parent=1 // pred_region
      _
    $region25: #{tpu_custom_call.1} parent=1 // pred_fallthru
      _
    // Predicated region
    $region26: #{tpu_custom_call.1} parent=1 // pred_check
      _
    $region27: #{tpu_custom_call.1} parent=1 // pred_check_branch
      %28 = sbr.rel (0) target = $region29
    $region28: #{tpu_custom_call.1} parent=1 // pred_region
      _
    $region29: #{tpu_custom_call.1} parent=1 // pred_fallthru
      _
    // Predicated region
    $region30: #{tpu_custom_call.1} parent=1 // pred_check
      _
    $region31: #{tpu_custom_call.1} parent=1 // pred_check_branch
      %30 = sbr.rel (0) target = $region33
    $region32: #{tpu_custom_call.1} parent=1 // pred_region
      _
    $region33: #{tpu_custom_call.1} parent=1 // pred_fallthru
      _
    // Predicated region
    $region34: #{tpu_custom_call.1} parent=1 // pred_check
      _
    $region35: #{tpu_custom_call.1} parent=1 // pred_check_branch
      %32 = sbr.rel (0) target = $region37
    $region36: #{tpu_custom_call.1} parent=1 // pred_region
      _
    $region37: #{tpu_custom_call.1} parent=1 // pred_fallthru
      _
    %v33 = vld [vmem:[%s1] sm:$0xff]
    %v34 = vld [vmem:[%s1 + $0x8] sm:$0xff]
    %v35 = vld [vmem:[%s1 + $0x10] sm:$0xff]
    %v36 = vld [vmem:[%s1 + $0x18] sm:$0xff]
    %v37 = vld [vmem:[%s3] sm:$0xff]
    %v38 = vld [vmem:[%s3 + $0x8] sm:$0xff]
    %v39 = vld [vmem:[%s3 + $0x10] sm:$0xff]
    %v40 = vld [vmem:[%s3 + $0x18] sm:$0xff]
    %v41 = vld [vmem:[%s3 + $0x20] sm:$0xff]
    %v42 = vld [vmem:[%s3 + $0x28] sm:$0xff]
    %v43 = vld [vmem:[%s3 + $0x30] sm:$0xff]
    %v44 = vld [vmem:[%s3 + $0x38] sm:$0xff]
    %v45 = vld [vmem:[%s3 + $0x40] sm:$0xff]
    %v46 = vld [vmem:[%s3 + $0x48] sm:$0xff]
    %v47 = vld [vmem:[%s3 + $0x50] sm:$0xff]
    %v48 = vld [vmem:[%s3 + $0x58] sm:$0xff]
    %v49 = vld [vmem:[%s3 + $0x60] sm:$0xff]
    %v50 = vld [vmem:[%s3 + $0x68] sm:$0xff]
    %v51 = vld [vmem:[%s3 + $0x70] sm:$0xff]
    %v52 = vld [vmem:[%s3 + $0x78] sm:$0xff]
    %53 = vmatpush.msra.mxu0 %v52
    %54 = vmatpush.msra.mxu0 %v51
    %55 = vmatpush.msra.mxu0 %v50
    %56 = vmatpush.msra.mxu0 %v49
    %57 = vmatpush.msra.mxu0 %v48
    %58 = vmatpush.msra.mxu0 %v47
    %59 = vmatpush.msra.mxu0 %v46
    %60 = vmatpush.msra.mxu0 %v45
    %61 = vmatpush.msra.mxu0 %v44
    %62 = vmatpush.msra.mxu0 %v43
    %63 = vmatpush.msra.mxu0 %v42
    %64 = vmatpush.msra.mxu0 %v41
    %65 = vmatpush.msra.mxu0 %v40
    %66 = vmatpush.msra.mxu0 %v39
    %67 = vmatpush.msra.mxu0 %v38
    %68 = vmatpush.msra.mxu0 %v37
    %69 = vmatmul.f32.gmra.mxu0 %v33
    %v70 = vpop.f32.mrf.mxu0
    %v71 = vadd.f32 0.0, %v70
    %72 = vmatmul.f32.gmra.mxu0 %v34
    %v73 = vpop.f32.mrf.mxu0
    %v74 = vadd.f32 0.0, %v73
    %75 = vmatmul.f32.gmra.mxu0 %v35
    %v76 = vpop.f32.mrf.mxu0
    %v77 = vadd.f32 0.0, %v76
    %78 = vmatmul.f32.gmra.mxu0 %v36
    %v79 = vpop.f32.mrf.mxu0
    %v80 = vadd.f32 0.0, %v79
    %81 = vdwg.mxu0
    %v82 = vld [vmem:[%s4] sm:$0xff]
    %v83 = vld [vmem:[%s4 + $0x8] sm:$0xff]
    %v84 = vld [vmem:[%s4 + $0x10] sm:$0xff]
    %v85 = vld [vmem:[%s4 + $0x18] sm:$0xff]
    %v86 = vld [vmem:[%s5] sm:$0xff]
    %v87 = vld [vmem:[%s5 + $0x8] sm:$0xff]
    %v88 = vld [vmem:[%s5 + $0x10] sm:$0xff]
    %v89 = vld [vmem:[%s5 + $0x18] sm:$0xff]
    %vm90 = vcmask 261120
    %v92 = vsel %vm90, %v82, 0
    %v95 = vsel %vm90, %v83, 0
    %v98 = vsel %vm90, %v84, 0
    %v101 = vsel %vm90, %v85, 0
    %103 = vmatpush.msra.mxu0 0.0
    %104 = vmatpush.msra.mxu0 0.0
    %105 = vmatpush.msra.mxu0 0.0
    %106 = vmatpush.msra.mxu0 0.0
    %107 = vmatpush.msra.mxu0 0.0
    %108 = vmatpush.msra.mxu0 0.0
    %109 = vmatpush.msra.mxu0 0.0
    %110 = vmatpush.msra.mxu0 0.0
    %111 = vmatpush.msra.mxu0 0.0
    %112 = vmatpush.msra.mxu0 0.0
    %113 = vmatpush.msra.mxu0 0.0
    %114 = vmatpush.msra.mxu0 0.0
    %115 = vmatpush.msra.mxu0 %v80
    %116 = vmatpush.msra.mxu0 %v77
    %117 = vmatpush.msra.mxu0 %v74
    %118 = vmatpush.msra.mxu0 %v71
    %119 = vmatmul.f32.gmra.mxu0 %v92
    %v120 = vpop.f32.mrf.mxu0
    %v121 = vadd.f32 %v86, %v120
    %122 = vmatmul.f32.gmra.mxu0 %v95
    %v123 = vpop.f32.mrf.mxu0
    %v124 = vadd.f32 %v87, %v123
    %125 = vmatmul.f32.gmra.mxu0 %v98
    %v126 = vpop.f32.mrf.mxu0
    %v127 = vadd.f32 %v88, %v126
    %128 = vmatmul.f32.gmra.mxu0 %v101
    %v129 = vpop.f32.mrf.mxu0
    %v130 = vadd.f32 %v89, %v129
    %131 = vdwg.mxu0
    %v132 = vmax.f32 %v121, 0.0
    %v133 = vmax.f32 %v124, 0.0
    %v134 = vmax.f32 %v127, 0.0
    %v135 = vmax.f32 %v130, 0.0
    %v136 = vmin.f32 %v132, 6.0
    %v137 = vmin.f32 %v133, 6.0
    %v138 = vmin.f32 %v134, 6.0
    %v139 = vmin.f32 %v135, 6.0
    %v140 = vld [vmem:[%s6] sm:$0xff]
    %v141 = vld [vmem:[%s6 + $0x8] sm:$0xff]
    %v142 = vld [vmem:[%s6 + $0x10] sm:$0xff]
    %v143 = vld [vmem:[%s6 + $0x18] sm:$0xff]
    %v144 = vld [vmem:[%s6 + $0x20] sm:$0xff]
    %v145 = vld [vmem:[%s6 + $0x28] sm:$0xff]
    %v146 = vld [vmem:[%s6 + $0x30] sm:$0xff]
    %v147 = vld [vmem:[%s6 + $0x38] sm:$0xff]
    %v148 = vld [vmem:[%s6 + $0x40] sm:$0xff]
    %v149 = vld [vmem:[%s6 + $0x48] sm:$0xff]
    %v150 = vld [vmem:[%s6 + $0x50] sm:$0xff]
    %v151 = vld [vmem:[%s6 + $0x58] sm:$0xff]
    %v152 = vld [vmem:[%s6 + $0x60] sm:$0xff]
    %v153 = vld [vmem:[%s6 + $0x68] sm:$0xff]
    %v154 = vld [vmem:[%s6 + $0x70] sm:$0xff]
    %v155 = vld [vmem:[%s6 + $0x78] sm:$0xff]
    %v156 = vld [vmem:[%s7] sm:$0xff]
    %v157 = vld [vmem:[%s7 + $0x8] sm:$0xff]
    %v158 = vld [vmem:[%s7 + $0x10] sm:$0xff]
    %v159 = vld [vmem:[%s7 + $0x18] sm:$0xff]
    %v160 = vld [vmem:[%s7 + $0x20] sm:$0xff]
    %v161 = vld [vmem:[%s7 + $0x28] sm:$0xff]
    %v162 = vld [vmem:[%s7 + $0x30] sm:$0xff]
    %v163 = vld [vmem:[%s7 + $0x38] sm:$0xff]
    %v164 = vld [vmem:[%s7 + $0x40] sm:$0xff]
    %v165 = vld [vmem:[%s7 + $0x48] sm:$0xff]
    %v166 = vld [vmem:[%s7 + $0x50] sm:$0xff]
    %v167 = vld [vmem:[%s7 + $0x58] sm:$0xff]
    %v168 = vld [vmem:[%s7 + $0x60] sm:$0xff]
    %v169 = vld [vmem:[%s7 + $0x68] sm:$0xff]
    %v170 = vld [vmem:[%s7 + $0x70] sm:$0xff]
    %v171 = vld [vmem:[%s7 + $0x78] sm:$0xff]
    %v173 = vsel %vm90, %v140, 0
    %v176 = vsel %vm90, %v141, 0
    %v179 = vsel %vm90, %v142, 0
    %v182 = vsel %vm90, %v143, 0
    %v185 = vsel %vm90, %v144, 0
    %v188 = vsel %vm90, %v145, 0
    %v191 = vsel %vm90, %v146, 0
    %v194 = vsel %vm90, %v147, 0
    %v197 = vsel %vm90, %v148, 0
    %v200 = vsel %vm90, %v149, 0
    %v203 = vsel %vm90, %v150, 0
    %v206 = vsel %vm90, %v151, 0
    %v209 = vsel %vm90, %v152, 0
    %v212 = vsel %vm90, %v153, 0
    %v215 = vsel %vm90, %v154, 0
    %v218 = vsel %vm90, %v155, 0
    %220 = vmatpush.msra.mxu0 0.0
    %221 = vmatpush.msra.mxu0 0.0
    %222 = vmatpush.msra.mxu0 0.0
    %223 = vmatpush.msra.mxu0 0.0
    %224 = vmatpush.msra.mxu0 0.0
    %225 = vmatpush.msra.mxu0 0.0
    %226 = vmatpush.msra.mxu0 0.0
    %227 = vmatpush.msra.mxu0 0.0
    %228 = vmatpush.msra.mxu0 0.0
    %229 = vmatpush.msra.mxu0 0.0
    %230 = vmatpush.msra.mxu0 0.0
    %231 = vmatpush.msra.mxu0 0.0
    %232 = vmatpush.msra.mxu0 %v139
    %233 = vmatpush.msra.mxu0 %v138
    %234 = vmatpush.msra.mxu0 %v137
    %235 = vmatpush.msra.mxu0 %v136
    %236 = vmatmul.f32.gmra.mxu0 %v173
    %v237 = vpop.f32.mrf.mxu0
    %v238 = vadd.f32 %v156, %v237
    %239 = vmatmul.f32.gmra.mxu0 %v176
    %v240 = vpop.f32.mrf.mxu0
    %v241 = vadd.f32 %v157, %v240
    %242 = vmatmul.f32.gmra.mxu0 %v179
    %v243 = vpop.f32.mrf.mxu0
    %v244 = vadd.f32 %v158, %v243
    %245 = vmatmul.f32.gmra.mxu0 %v182
    %v246 = vpop.f32.mrf.mxu0
    %v247 = vadd.f32 %v159, %v246
    %248 = vmatmul.f32.gmra.mxu0 %v185
    %v249 = vpop.f32.mrf.mxu0
    %v250 = vadd.f32 %v160, %v249
    %251 = vmatmul.f32.gmra.mxu0 %v188
    %v252 = vpop.f32.mrf.mxu0
    %v253 = vadd.f32 %v161, %v252
    %254 = vmatmul.f32.gmra.mxu0 %v191
    %v255 = vpop.f32.mrf.mxu0
    %v256 = vadd.f32 %v162, %v255
    %257 = vmatmul.f32.gmra.mxu0 %v194
    %v258 = vpop.f32.mrf.mxu0
    %v259 = vadd.f32 %v163, %v258
    %260 = vmatmul.f32.gmra.mxu0 %v197
    %v261 = vpop.f32.mrf.mxu0
    %v262 = vadd.f32 %v164, %v261
    %263 = vmatmul.f32.gmra.mxu0 %v200
    %v264 = vpop.f32.mrf.mxu0
    %v265 = vadd.f32 %v165, %v264
    %266 = vmatmul.f32.gmra.mxu0 %v203
    %v267 = vpop.f32.mrf.mxu0
    %v268 = vadd.f32 %v166, %v267
    %269 = vmatmul.f32.gmra.mxu0 %v206
    %v270 = vpop.f32.mrf.mxu0
    %v271 = vadd.f32 %v167, %v270
    %272 = vmatmul.f32.gmra.mxu0 %v209
    %v273 = vpop.f32.mrf.mxu0
    %v274 = vadd.f32 %v168, %v273
    %275 = vmatmul.f32.gmra.mxu0 %v212
    %v276 = vpop.f32.mrf.mxu0
    %v277 = vadd.f32 %v169, %v276
    %278 = vmatmul.f32.gmra.mxu0 %v215
    %v279 = vpop.f32.mrf.mxu0
    %v280 = vadd.f32 %v170, %v279
    %281 = vmatmul.f32.gmra.mxu0 %v218
    %v282 = vpop.f32.mrf.mxu0
    %v283 = vadd.f32 %v171, %v282
    %284 = vdwg.mxu0
    %v285 = vxor.u32 %v238, 2147483648
    %v286 = vxor.u32 %v241, 2147483648
    %v287 = vxor.u32 %v244, 2147483648
    %v288 = vxor.u32 %v247, 2147483648
    %v289 = vxor.u32 %v250, 2147483648
    %v290 = vxor.u32 %v253, 2147483648
    %v291 = vxor.u32 %v256, 2147483648
    %v292 = vxor.u32 %v259, 2147483648
    %v293 = vxor.u32 %v262, 2147483648
    %v294 = vxor.u32 %v265, 2147483648
    %v295 = vxor.u32 %v268, 2147483648
    %v296 = vxor.u32 %v271, 2147483648
    %v297 = vxor.u32 %v274, 2147483648
    %v298 = vxor.u32 %v277, 2147483648
    %v299 = vxor.u32 %v280, 2147483648
    %v300 = vxor.u32 %v283, 2147483648
    %v301 = vmul.f32 %v285, 1.442695
    %v302 = vpow.pop %v301
    %v303 = vmul.f32 %v286, 1.442695
    %v304 = vpow.pop %v303
    %v305 = vmul.f32 %v287, 1.442695
    %v306 = vpow.pop %v305
    %v307 = vmul.f32 %v288, 1.442695
    %v308 = vpow.pop %v307
    %v309 = vmul.f32 %v289, 1.442695
    %v310 = vpow.pop %v309
    %v311 = vmul.f32 %v290, 1.442695
    %v312 = vpow.pop %v311
    %v313 = vmul.f32 %v291, 1.442695
    %v314 = vpow.pop %v313
    %v315 = vmul.f32 %v292, 1.442695
    %v316 = vpow.pop %v315
    %v317 = vmul.f32 %v293, 1.442695
    %v318 = vpow.pop %v317
    %v319 = vmul.f32 %v294, 1.442695
    %v320 = vpow.pop %v319
    %v321 = vmul.f32 %v295, 1.442695
    %v322 = vpow.pop %v321
    %v323 = vmul.f32 %v296, 1.442695
    %v324 = vpow.pop %v323
    %v325 = vmul.f32 %v297, 1.442695
    %v326 = vpow.pop %v325
    %v327 = vmul.f32 %v298, 1.442695
    %v328 = vpow.pop %v327
    %v329 = vmul.f32 %v299, 1.442695
    %v330 = vpow.pop %v329
    %v331 = vmul.f32 %v300, 1.442695
    %v332 = vpow.pop %v331
    %v333 = vadd.f32 %v302, 1.0
    %v334 = vadd.f32 %v304, 1.0
    %v335 = vadd.f32 %v306, 1.0
    %v336 = vadd.f32 %v308, 1.0
    %v337 = vadd.f32 %v310, 1.0
    %v338 = vadd.f32 %v312, 1.0
    %v339 = vadd.f32 %v314, 1.0
    %v340 = vadd.f32 %v316, 1.0
    %v341 = vadd.f32 %v318, 1.0
    %v342 = vadd.f32 %v320, 1.0
    %v343 = vadd.f32 %v322, 1.0
    %v344 = vadd.f32 %v324, 1.0
    %v345 = vadd.f32 %v326, 1.0
    %v346 = vadd.f32 %v328, 1.0
    %v347 = vadd.f32 %v330, 1.0
    %v348 = vadd.f32 %v332, 1.0
    %v349 = vrcp.pop %v333
    %v350 = vmul.f32 %v333, %v349
    %v351 = vsub.f32 1.0, %v350
    %v352 = vmul.f32 %v349, %v351
    %v353 = vadd.f32 %v349, %v352
    %vm354 = vweird.f32 %v333
    %vm355 = vweird.f32 %v349
    %vm356 = vmor %vm354, %vm355
    %v357 = vsel %vm356, %v349, %v353
    %v358 = vand.u32 2147483647, %v333
    %vm359 = vcmp.eq.f32.partialorder %v358, 8.507059e+37
    %v360 = vand.u32 %v333, 2147483648
    %v361 = vor.u32 1.1754944e-38, %v360
    %v362 = vsel %vm359, %v361, %v357
    %v363 = vmul.f32 1.0, %v362
    %v364 = vrcp.pop %v334
    %v365 = vmul.f32 %v334, %v364
    %v366 = vsub.f32 1.0, %v365
    %v367 = vmul.f32 %v364, %v366
    %v368 = vadd.f32 %v364, %v367
    %vm369 = vweird.f32 %v334
    %vm370 = vweird.f32 %v364
    %vm371 = vmor %vm369, %vm370
    %v372 = vsel %vm371, %v364, %v368
    %v373 = vand.u32 2147483647, %v334
    %vm374 = vcmp.eq.f32.partialorder %v373, 8.507059e+37
    %v375 = vand.u32 %v334, 2147483648
    %v376 = vor.u32 1.1754944e-38, %v375
    %v377 = vsel %vm374, %v376, %v372
    %v378 = vmul.f32 1.0, %v377
    %v379 = vrcp.pop %v335
    %v380 = vmul.f32 %v335, %v379
    %v381 = vsub.f32 1.0, %v380
    %v382 = vmul.f32 %v379, %v381
    %v383 = vadd.f32 %v379, %v382
    %vm384 = vweird.f32 %v335
    %vm385 = vweird.f32 %v379
    %vm386 = vmor %vm384, %vm385
    %v387 = vsel %vm386, %v379, %v383
    %v388 = vand.u32 2147483647, %v335
    %vm389 = vcmp.eq.f32.partialorder %v388, 8.507059e+37
    %v390 = vand.u32 %v335, 2147483648
    %v391 = vor.u32 1.1754944e-38, %v390
    %v392 = vsel %vm389, %v391, %v387
    %v393 = vmul.f32 1.0, %v392
    %v394 = vrcp.pop %v336
    %v395 = vmul.f32 %v336, %v394
    %v396 = vsub.f32 1.0, %v395
    %v397 = vmul.f32 %v394, %v396
    %v398 = vadd.f32 %v394, %v397
    %vm399 = vweird.f32 %v336
    %vm400 = vweird.f32 %v394
    %vm401 = vmor %vm399, %vm400
    %v402 = vsel %vm401, %v394, %v398
    %v403 = vand.u32 2147483647, %v336
    %vm404 = vcmp.eq.f32.partialorder %v403, 8.507059e+37
    %v405 = vand.u32 %v336, 2147483648
    %v406 = vor.u32 1.1754944e-38, %v405
    %v407 = vsel %vm404, %v406, %v402
    %v408 = vmul.f32 1.0, %v407
    %v409 = vrcp.pop %v337
    %v410 = vmul.f32 %v337, %v409
    %v411 = vsub.f32 1.0, %v410
    %v412 = vmul.f32 %v409, %v411
    %v413 = vadd.f32 %v409, %v412
    %vm414 = vweird.f32 %v337
    %vm415 = vweird.f32 %v409
    %vm416 = vmor %vm414, %vm415
    %v417 = vsel %vm416, %v409, %v413
    %v418 = vand.u32 2147483647, %v337
    %vm419 = vcmp.eq.f32.partialorder %v418, 8.507059e+37
    %v420 = vand.u32 %v337, 2147483648
    %v421 = vor.u32 1.1754944e-38, %v420
    %v422 = vsel %vm419, %v421, %v417
    %v423 = vmul.f32 1.0, %v422
    %v424 = vrcp.pop %v338
    %v425 = vmul.f32 %v338, %v424
    %v426 = vsub.f32 1.0, %v425
    %v427 = vmul.f32 %v424, %v426
    %v428 = vadd.f32 %v424, %v427
    %vm429 = vweird.f32 %v338
    %vm430 = vweird.f32 %v424
    %vm431 = vmor %vm429, %vm430
    %v432 = vsel %vm431, %v424, %v428
    %v433 = vand.u32 2147483647, %v338
    %vm434 = vcmp.eq.f32.partialorder %v433, 8.507059e+37
    %v435 = vand.u32 %v338, 2147483648
    %v436 = vor.u32 1.1754944e-38, %v435
    %v437 = vsel %vm434, %v436, %v432
    %v438 = vmul.f32 1.0, %v437
    %v439 = vrcp.pop %v339
    %v440 = vmul.f32 %v339, %v439
    %v441 = vsub.f32 1.0, %v440
    %v442 = vmul.f32 %v439, %v441
    %v443 = vadd.f32 %v439, %v442
    %vm444 = vweird.f32 %v339
    %vm445 = vweird.f32 %v439
    %vm446 = vmor %vm444, %vm445
    %v447 = vsel %vm446, %v439, %v443
    %v448 = vand.u32 2147483647, %v339
    %vm449 = vcmp.eq.f32.partialorder %v448, 8.507059e+37
    %v450 = vand.u32 %v339, 2147483648
    %v451 = vor.u32 1.1754944e-38, %v450
    %v452 = vsel %vm449, %v451, %v447
    %v453 = vmul.f32 1.0, %v452
    %v454 = vrcp.pop %v340
    %v455 = vmul.f32 %v340, %v454
    %v456 = vsub.f32 1.0, %v455
    %v457 = vmul.f32 %v454, %v456
    %v458 = vadd.f32 %v454, %v457
    %vm459 = vweird.f32 %v340
    %vm460 = vweird.f32 %v454
    %vm461 = vmor %vm459, %vm460
    %v462 = vsel %vm461, %v454, %v458
    %v463 = vand.u32 2147483647, %v340
    %vm464 = vcmp.eq.f32.partialorder %v463, 8.507059e+37
    %v465 = vand.u32 %v340, 2147483648
    %v466 = vor.u32 1.1754944e-38, %v465
    %v467 = vsel %vm464, %v466, %v462
    %v468 = vmul.f32 1.0, %v467
    %v469 = vrcp.pop %v341
    %v470 = vmul.f32 %v341, %v469
    %v471 = vsub.f32 1.0, %v470
    %v472 = vmul.f32 %v469, %v471
    %v473 = vadd.f32 %v469, %v472
    %vm474 = vweird.f32 %v341
    %vm475 = vweird.f32 %v469
    %vm476 = vmor %vm474, %vm475
    %v477 = vsel %vm476, %v469, %v473
    %v478 = vand.u32 2147483647, %v341
    %vm479 = vcmp.eq.f32.partialorder %v478, 8.507059e+37
    %v480 = vand.u32 %v341, 2147483648
    %v481 = vor.u32 1.1754944e-38, %v480
    %v482 = vsel %vm479, %v481, %v477
    %v483 = vmul.f32 1.0, %v482
    %v484 = vrcp.pop %v342
    %v485 = vmul.f32 %v342, %v484
    %v486 = vsub.f32 1.0, %v485
    %v487 = vmul.f32 %v484, %v486
    %v488 = vadd.f32 %v484, %v487
    %vm489 = vweird.f32 %v342
    %vm490 = vweird.f32 %v484
    %vm491 = vmor %vm489, %vm490
    %v492 = vsel %vm491, %v484, %v488
    %v493 = vand.u32 2147483647, %v342
    %vm494 = vcmp.eq.f32.partialorder %v493, 8.507059e+37
    %v495 = vand.u32 %v342, 2147483648
    %v496 = vor.u32 1.1754944e-38, %v495
    %v497 = vsel %vm494, %v496, %v492
    %v498 = vmul.f32 1.0, %v497
    %v499 = vrcp.pop %v343
    %v500 = vmul.f32 %v343, %v499
    %v501 = vsub.f32 1.0, %v500
    %v502 = vmul.f32 %v499, %v501
    %v503 = vadd.f32 %v499, %v502
    %vm504 = vweird.f32 %v343
    %vm505 = vweird.f32 %v499
    %vm506 = vmor %vm504, %vm505
    %v507 = vsel %vm506, %v499, %v503
    %v508 = vand.u32 2147483647, %v343
    %vm509 = vcmp.eq.f32.partialorder %v508, 8.507059e+37
    %v510 = vand.u32 %v343, 2147483648
    %v511 = vor.u32 1.1754944e-38, %v510
    %v512 = vsel %vm509, %v511, %v507
    %v513 = vmul.f32 1.0, %v512
    %v514 = vrcp.pop %v344
    %v515 = vmul.f32 %v344, %v514
    %v516 = vsub.f32 1.0, %v515
    %v517 = vmul.f32 %v514, %v516
    %v518 = vadd.f32 %v514, %v517
    %vm519 = vweird.f32 %v344
    %vm520 = vweird.f32 %v514
    %vm521 = vmor %vm519, %vm520
    %v522 = vsel %vm521, %v514, %v518
    %v523 = vand.u32 2147483647, %v344
    %vm524 = vcmp.eq.f32.partialorder %v523, 8.507059e+37
    %v525 = vand.u32 %v344, 2147483648
    %v526 = vor.u32 1.1754944e-38, %v525
    %v527 = vsel %vm524, %v526, %v522
    %v528 = vmul.f32 1.0, %v527
    %v529 = vrcp.pop %v345
    %v530 = vmul.f32 %v345, %v529
    %v531 = vsub.f32 1.0, %v530
    %v532 = vmul.f32 %v529, %v531
    %v533 = vadd.f32 %v529, %v532
    %vm534 = vweird.f32 %v345
    %vm535 = vweird.f32 %v529
    %vm536 = vmor %vm534, %vm535
    %v537 = vsel %vm536, %v529, %v533
    %v538 = vand.u32 2147483647, %v345
    %vm539 = vcmp.eq.f32.partialorder %v538, 8.507059e+37
    %v540 = vand.u32 %v345, 2147483648
    %v541 = vor.u32 1.1754944e-38, %v540
    %v542 = vsel %vm539, %v541, %v537
    %v543 = vmul.f32 1.0, %v542
    %v544 = vrcp.pop %v346
    %v545 = vmul.f32 %v346, %v544
    %v546 = vsub.f32 1.0, %v545
    %v547 = vmul.f32 %v544, %v546
    %v548 = vadd.f32 %v544, %v547
    %vm549 = vweird.f32 %v346
    %vm550 = vweird.f32 %v544
    %vm551 = vmor %vm549, %vm550
    %v552 = vsel %vm551, %v544, %v548
    %v553 = vand.u32 2147483647, %v346
    %vm554 = vcmp.eq.f32.partialorder %v553, 8.507059e+37
    %v555 = vand.u32 %v346, 2147483648
    %v556 = vor.u32 1.1754944e-38, %v555
    %v557 = vsel %vm554, %v556, %v552
    %v558 = vmul.f32 1.0, %v557
    %v559 = vrcp.pop %v347
    %v560 = vmul.f32 %v347, %v559
    %v561 = vsub.f32 1.0, %v560
    %v562 = vmul.f32 %v559, %v561
    %v563 = vadd.f32 %v559, %v562
    %vm564 = vweird.f32 %v347
    %vm565 = vweird.f32 %v559
    %vm566 = vmor %vm564, %vm565
    %v567 = vsel %vm566, %v559, %v563
    %v568 = vand.u32 2147483647, %v347
    %vm569 = vcmp.eq.f32.partialorder %v568, 8.507059e+37
    %v570 = vand.u32 %v347, 2147483648
    %v571 = vor.u32 1.1754944e-38, %v570
    %v572 = vsel %vm569, %v571, %v567
    %v573 = vmul.f32 1.0, %v572
    %v574 = vrcp.pop %v348
    %v575 = vmul.f32 %v348, %v574
    %v576 = vsub.f32 1.0, %v575
    %v577 = vmul.f32 %v574, %v576
    %v578 = vadd.f32 %v574, %v577
    %vm579 = vweird.f32 %v348
    %vm580 = vweird.f32 %v574
    %vm581 = vmor %vm579, %vm580
    %v582 = vsel %vm581, %v574, %v578
    %v583 = vand.u32 2147483647, %v348
    %vm584 = vcmp.eq.f32.partialorder %v583, 8.507059e+37
    %v585 = vand.u32 %v348, 2147483648
    %v586 = vor.u32 1.1754944e-38, %v585
    %v587 = vsel %vm584, %v586, %v582
    %v588 = vmul.f32 1.0, %v587
    %v589 = vld [vmem:[%s0] sm:$0xff]
    %v590 = vld [vmem:[%s0 + $0x8] sm:$0xff]
    %v591 = vld [vmem:[%s0 + $0x10] sm:$0xff]
    %v592 = vld [vmem:[%s0 + $0x18] sm:$0xff]
    %v593 = vld [vmem:[%s0 + $0x20] sm:$0xff]
    %v594 = vld [vmem:[%s0 + $0x28] sm:$0xff]
    %v595 = vld [vmem:[%s0 + $0x30] sm:$0xff]
    %v596 = vld [vmem:[%s0 + $0x38] sm:$0xff]
    %v597 = vld [vmem:[%s0 + $0x40] sm:$0xff]
    %v598 = vld [vmem:[%s0 + $0x48] sm:$0xff]
    %v599 = vld [vmem:[%s0 + $0x50] sm:$0xff]
    %v600 = vld [vmem:[%s0 + $0x58] sm:$0xff]
    %v601 = vld [vmem:[%s0 + $0x60] sm:$0xff]
    %v602 = vld [vmem:[%s0 + $0x68] sm:$0xff]
    %v603 = vld [vmem:[%s0 + $0x70] sm:$0xff]
    %v604 = vld [vmem:[%s0 + $0x78] sm:$0xff]
    %606 = vset.pattern.permute.xlu0 0
    %607 = vperm.xlu0 %606, %v589
    %v608 = vpop.permute.xlu0 %607
    %611 = vset.pattern.permute.xlu0 0
    %612 = vperm.xlu0 %611, %v590
    %v613 = vpop.permute.xlu0 %612
    %616 = vset.pattern.permute.xlu0 0
    %617 = vperm.xlu0 %616, %v591
    %v618 = vpop.permute.xlu0 %617
    %621 = vset.pattern.permute.xlu0 0
    %622 = vperm.xlu0 %621, %v592
    %v623 = vpop.permute.xlu0 %622
    %626 = vset.pattern.permute.xlu0 0
    %627 = vperm.xlu0 %626, %v593
    %v628 = vpop.permute.xlu0 %627
    %631 = vset.pattern.permute.xlu0 0
    %632 = vperm.xlu0 %631, %v594
    %v633 = vpop.permute.xlu0 %632
    %636 = vset.pattern.permute.xlu0 0
    %637 = vperm.xlu0 %636, %v595
    %v638 = vpop.permute.xlu0 %637
    %641 = vset.pattern.permute.xlu0 0
    %642 = vperm.xlu0 %641, %v596
    %v643 = vpop.permute.xlu0 %642
    %646 = vset.pattern.permute.xlu0 0
    %647 = vperm.xlu0 %646, %v597
    %v648 = vpop.permute.xlu0 %647
    %651 = vset.pattern.permute.xlu0 0
    %652 = vperm.xlu0 %651, %v598
    %v653 = vpop.permute.xlu0 %652
    %656 = vset.pattern.permute.xlu0 0
    %657 = vperm.xlu0 %656, %v599
    %v658 = vpop.permute.xlu0 %657
    %661 = vset.pattern.permute.xlu0 0
    %662 = vperm.xlu0 %661, %v600
    %v663 = vpop.permute.xlu0 %662
    %666 = vset.pattern.permute.xlu0 0
    %667 = vperm.xlu0 %666, %v601
    %v668 = vpop.permute.xlu0 %667
    %671 = vset.pattern.permute.xlu0 0
    %672 = vperm.xlu0 %671, %v602
    %v673 = vpop.permute.xlu0 %672
    %676 = vset.pattern.permute.xlu0 0
    %677 = vperm.xlu0 %676, %v603
    %v678 = vpop.permute.xlu0 %677
    %681 = vset.pattern.permute.xlu0 0
    %682 = vperm.xlu0 %681, %v604
    %v683 = vpop.permute.xlu0 %682
    %v685 = vmul.f32 %v608, %v363
    %v686 = vmul.f32 %v613, %v378
    %v687 = vmul.f32 %v618, %v393
    %v688 = vmul.f32 %v623, %v408
    %v689 = vmul.f32 %v628, %v423
    %v690 = vmul.f32 %v633, %v438
    %v691 = vmul.f32 %v638, %v453
    %v692 = vmul.f32 %v643, %v468
    %v693 = vmul.f32 %v648, %v483
    %v694 = vmul.f32 %v653, %v498
    %v695 = vmul.f32 %v658, %v513
    %v696 = vmul.f32 %v663, %v528
    %v697 = vmul.f32 %v668, %v543
    %v698 = vmul.f32 %v673, %v558
    %v699 = vmul.f32 %v678, %v573
    %v700 = vmul.f32 %v683, %v588
    %v701 = vld [vmem:[%s8] sm:$0xff]
    %v702 = vld [vmem:[%s8 + $0x8] sm:$0xff]
    %v703 = vld [vmem:[%s8 + $0x10] sm:$0xff]
    %v704 = vld [vmem:[%s8 + $0x18] sm:$0xff]
    %v705 = vld [vmem:[%s2] sm:$0xff]
    %v706 = vld [vmem:[%s2 + $0x8] sm:$0xff]
    %v707 = vld [vmem:[%s2 + $0x10] sm:$0xff]
    %v708 = vld [vmem:[%s2 + $0x18] sm:$0xff]
    %v709 = vld [vmem:[%s2 + $0x20] sm:$0xff]
    %v710 = vld [vmem:[%s2 + $0x28] sm:$0xff]
    %v711 = vld [vmem:[%s2 + $0x30] sm:$0xff]
    %v712 = vld [vmem:[%s2 + $0x38] sm:$0xff]
    %v713 = vld [vmem:[%s2 + $0x40] sm:$0xff]
    %v714 = vld [vmem:[%s2 + $0x48] sm:$0xff]
    %v715 = vld [vmem:[%s2 + $0x50] sm:$0xff]
    %v716 = vld [vmem:[%s2 + $0x58] sm:$0xff]
    %v717 = vld [vmem:[%s2 + $0x60] sm:$0xff]
    %v718 = vld [vmem:[%s2 + $0x68] sm:$0xff]
    %v719 = vld [vmem:[%s2 + $0x70] sm:$0xff]
    %v720 = vld [vmem:[%s2 + $0x78] sm:$0xff]
    %v721 = vld [vmem:[%s2 + $0x80] sm:$0xff]
    %v722 = vld [vmem:[%s2 + $0x88] sm:$0xff]
    %v723 = vld [vmem:[%s2 + $0x90] sm:$0xff]
    %v724 = vld [vmem:[%s2 + $0x98] sm:$0xff]
    %v725 = vld [vmem:[%s2 + $0xa0] sm:$0xff]
    %v726 = vld [vmem:[%s2 + $0xa8] sm:$0xff]
    %v727 = vld [vmem:[%s2 + $0xb0] sm:$0xff]
    %v728 = vld [vmem:[%s2 + $0xb8] sm:$0xff]
    %v729 = vld [vmem:[%s2 + $0xc0] sm:$0xff]
    %v730 = vld [vmem:[%s2 + $0xc8] sm:$0xff]
    %v731 = vld [vmem:[%s2 + $0xd0] sm:$0xff]
    %v732 = vld [vmem:[%s2 + $0xd8] sm:$0xff]
    %v733 = vld [vmem:[%s2 + $0xe0] sm:$0xff]
    %v734 = vld [vmem:[%s2 + $0xe8] sm:$0xff]
    %v735 = vld [vmem:[%s2 + $0xf0] sm:$0xff]
    %v736 = vld [vmem:[%s2 + $0xf8] sm:$0xff]
    %vm737 = vcmask 130048
    %v739 = vsel %vm737, %v685, 0
    %v742 = vsel %vm737, %v686, 0
    %v745 = vsel %vm737, %v687, 0
    %v748 = vsel %vm737, %v688, 0
    %v751 = vsel %vm737, %v689, 0
    %v754 = vsel %vm737, %v690, 0
    %v757 = vsel %vm737, %v691, 0
    %v760 = vsel %vm737, %v692, 0
    %v763 = vsel %vm737, %v693, 0
    %v766 = vsel %vm737, %v694, 0
    %v769 = vsel %vm737, %v695, 0
    %v772 = vsel %vm737, %v696, 0
    %v775 = vsel %vm737, %v697, 0
    %v778 = vsel %vm737, %v698, 0
    %v781 = vsel %vm737, %v699, 0
    %v784 = vsel %vm737, %v700, 0
    %786 = vmatpush.msra.mxu0 0.0
    %787 = vmatpush.msra.mxu0 0.0
    %788 = vmatpush.msra.mxu0 0.0
    %789 = vmatpush.msra.mxu0 0.0
    %790 = vmatpush.msra.mxu0 0.0
    %791 = vmatpush.msra.mxu0 0.0
    %792 = vmatpush.msra.mxu0 0.0
    %793 = vmatpush.msra.mxu0 0.0
    %794 = vmatpush.msra.mxu0 0.0
    %795 = vmatpush.msra.mxu0 0.0
    %796 = vmatpush.msra.mxu0 0.0
    %797 = vmatpush.msra.mxu0 0.0
    %798 = vmatpush.msra.mxu0 0.0
    %799 = vmatpush.msra.mxu0 0.0
    %800 = vmatpush.msra.mxu0 %v703
    %801 = vmatpush.msra.mxu0 %v701
    %802 = vmatmul.f32.gmra.mxu0 %v739
    %v803 = vpop.f32.mrf.mxu0
    %v804 = vadd.f32 1.0, %v803
    %805 = vmatmul.f32.gmra.mxu0 %v742
    %v806 = vpop.f32.mrf.mxu0
    %v807 = vadd.f32 1.0, %v806
    %808 = vmatmul.f32.gmra.mxu0 %v745
    %v809 = vpop.f32.mrf.mxu0
    %v810 = vadd.f32 1.0, %v809
    %811 = vmatmul.f32.gmra.mxu0 %v748
    %v812 = vpop.f32.mrf.mxu0
    %v813 = vadd.f32 1.0, %v812
    %814 = vmatmul.f32.gmra.mxu0 %v751
    %v815 = vpop.f32.mrf.mxu0
    %v816 = vadd.f32 1.0, %v815
    %817 = vmatmul.f32.gmra.mxu0 %v754
    %v818 = vpop.f32.mrf.mxu0
    %v819 = vadd.f32 1.0, %v818
    %820 = vmatmul.f32.gmra.mxu0 %v757
    %v821 = vpop.f32.mrf.mxu0
    %v822 = vadd.f32 1.0, %v821
    %823 = vmatmul.f32.gmra.mxu0 %v760
    %v824 = vpop.f32.mrf.mxu0
    %v825 = vadd.f32 1.0, %v824
    %826 = vmatmul.f32.gmra.mxu0 %v763
    %v827 = vpop.f32.mrf.mxu0
    %v828 = vadd.f32 1.0, %v827
    %829 = vmatmul.f32.gmra.mxu0 %v766
    %v830 = vpop.f32.mrf.mxu0
    %v831 = vadd.f32 1.0, %v830
    %832 = vmatmul.f32.gmra.mxu0 %v769
    %v833 = vpop.f32.mrf.mxu0
    %v834 = vadd.f32 1.0, %v833
    %835 = vmatmul.f32.gmra.mxu0 %v772
    %v836 = vpop.f32.mrf.mxu0
    %v837 = vadd.f32 1.0, %v836
    %838 = vmatmul.f32.gmra.mxu0 %v775
    %v839 = vpop.f32.mrf.mxu0
    %v840 = vadd.f32 1.0, %v839
    %841 = vmatmul.f32.gmra.mxu0 %v778
    %v842 = vpop.f32.mrf.mxu0
    %v843 = vadd.f32 1.0, %v842
    %844 = vmatmul.f32.gmra.mxu0 %v781
    %v845 = vpop.f32.mrf.mxu0
    %v846 = vadd.f32 1.0, %v845
    %847 = vmatmul.f32.gmra.mxu0 %v784
    %v848 = vpop.f32.mrf.mxu0
    %v849 = vadd.f32 1.0, %v848
    %850 = vdwg.mxu0
    %851 = vmatpush.msra.mxu0 0.0
    %852 = vmatpush.msra.mxu0 0.0
    %853 = vmatpush.msra.mxu0 0.0
    %854 = vmatpush.msra.mxu0 0.0
    %855 = vmatpush.msra.mxu0 0.0
    %856 = vmatpush.msra.mxu0 0.0
    %857 = vmatpush.msra.mxu0 0.0
    %858 = vmatpush.msra.mxu0 0.0
    %859 = vmatpush.msra.mxu0 0.0
    %860 = vmatpush.msra.mxu0 0.0
    %861 = vmatpush.msra.mxu0 0.0
    %862 = vmatpush.msra.mxu0 0.0
    %863 = vmatpush.msra.mxu0 0.0
    %864 = vmatpush.msra.mxu0 0.0
    %865 = vmatpush.msra.mxu0 %v704
    %866 = vmatpush.msra.mxu0 %v702
    %867 = vmatmul.f32.gmra.mxu0 %v739
    %v868 = vpop.f32.mrf.mxu0
    %v869 = vadd.f32 1.0, %v868
    %870 = vmatmul.f32.gmra.mxu0 %v742
    %v871 = vpop.f32.mrf.mxu0
    %v872 = vadd.f32 1.0, %v871
    %873 = vmatmul.f32.gmra.mxu0 %v745
    %v874 = vpop.f32.mrf.mxu0
    %v875 = vadd.f32 1.0, %v874
    %876 = vmatmul.f32.gmra.mxu0 %v748
    %v877 = vpop.f32.mrf.mxu0
    %v878 = vadd.f32 1.0, %v877
    %879 = vmatmul.f32.gmra.mxu0 %v751
    %v880 = vpop.f32.mrf.mxu0
    %v881 = vadd.f32 1.0, %v880
    %882 = vmatmul.f32.gmra.mxu0 %v754
    %v883 = vpop.f32.mrf.mxu0
    %v884 = vadd.f32 1.0, %v883
    %885 = vmatmul.f32.gmra.mxu0 %v757
    %v886 = vpop.f32.mrf.mxu0
    %v887 = vadd.f32 1.0, %v886
    %888 = vmatmul.f32.gmra.mxu0 %v760
    %v889 = vpop.f32.mrf.mxu0
    %v890 = vadd.f32 1.0, %v889
    %891 = vmatmul.f32.gmra.mxu0 %v763
    %v892 = vpop.f32.mrf.mxu0
    %v893 = vadd.f32 1.0, %v892
    %894 = vmatmul.f32.gmra.mxu0 %v766
    %v895 = vpop.f32.mrf.mxu0
    %v896 = vadd.f32 1.0, %v895
    %897 = vmatmul.f32.gmra.mxu0 %v769
    %v898 = vpop.f32.mrf.mxu0
    %v899 = vadd.f32 1.0, %v898
    %900 = vmatmul.f32.gmra.mxu0 %v772
    %v901 = vpop.f32.mrf.mxu0
    %v902 = vadd.f32 1.0, %v901
    %903 = vmatmul.f32.gmra.mxu0 %v775
    %v904 = vpop.f32.mrf.mxu0
    %v905 = vadd.f32 1.0, %v904
    %906 = vmatmul.f32.gmra.mxu0 %v778
    %v907 = vpop.f32.mrf.mxu0
    %v908 = vadd.f32 1.0, %v907
    %909 = vmatmul.f32.gmra.mxu0 %v781
    %v910 = vpop.f32.mrf.mxu0
    %v911 = vadd.f32 1.0, %v910
    %912 = vmatmul.f32.gmra.mxu0 %v784
    %v913 = vpop.f32.mrf.mxu0
    %v914 = vadd.f32 1.0, %v913
    %915 = vdwg.mxu0
    %v916 = vmul.f32 %v705, %v804
    %v917 = vmul.f32 %v706, %v869
    %v918 = vmul.f32 %v707, %v807
    %v919 = vmul.f32 %v708, %v872
    %v920 = vmul.f32 %v709, %v810
    %v921 = vmul.f32 %v710, %v875
    %v922 = vmul.f32 %v711, %v813
    %v923 = vmul.f32 %v712, %v878
    %v924 = vmul.f32 %v713, %v816
    %v925 = vmul.f32 %v714, %v881
    %v926 = vmul.f32 %v715, %v819
    %v927 = vmul.f32 %v716, %v884
    %v928 = vmul.f32 %v717, %v822
    %v929 = vmul.f32 %v718, %v887
    %v930 = vmul.f32 %v719, %v825
    %v931 = vmul.f32 %v720, %v890
    %v932 = vmul.f32 %v721, %v828
    %v933 = vmul.f32 %v722, %v893
    %v934 = vmul.f32 %v723, %v831
    %v935 = vmul.f32 %v724, %v896
    %v936 = vmul.f32 %v725, %v834
    %v937 = vmul.f32 %v726, %v899
    %v938 = vmul.f32 %v727, %v837
    %v939 = vmul.f32 %v728, %v902
    %v940 = vmul.f32 %v729, %v840
    %v941 = vmul.f32 %v730, %v905
    %v942 = vmul.f32 %v731, %v843
    %v943 = vmul.f32 %v732, %v908
    %v944 = vmul.f32 %v733, %v846
    %v945 = vmul.f32 %v734, %v911
    %v946 = vmul.f32 %v735, %v849
    %v947 = vmul.f32 %v736, %v914
    %948 = vst [vmem:[#allocation2] sm:$0xff] %v916
    %949 = vst [vmem:[#allocation2 + $0x8] sm:$0xff] %v917
    %950 = vst [vmem:[#allocation2 + $0x10] sm:$0xff] %v918
    %951 = vst [vmem:[#allocation2 + $0x18] sm:$0xff] %v919
    %952 = vst [vmem:[#allocation2 + $0x20] sm:$0xff] %v920
    %953 = vst [vmem:[#allocation2 + $0x28] sm:$0xff] %v921
    %954 = vst [vmem:[#allocation2 + $0x30] sm:$0xff] %v922
    %955 = vst [vmem:[#allocation2 + $0x38] sm:$0xff] %v923
    %956 = vst [vmem:[#allocation2 + $0x40] sm:$0xff] %v924
    %957 = vst [vmem:[#allocation2 + $0x48] sm:$0xff] %v925
    %958 = vst [vmem:[#allocation2 + $0x50] sm:$0xff] %v926
    %959 = vst [vmem:[#allocation2 + $0x58] sm:$0xff] %v927
    %960 = vst [vmem:[#allocation2 + $0x60] sm:$0xff] %v928
    %961 = vst [vmem:[#allocation2 + $0x68] sm:$0xff] %v929
    %962 = vst [vmem:[#allocation2 + $0x70] sm:$0xff] %v930
    %963 = vst [vmem:[#allocation2 + $0x78] sm:$0xff] %v931
    %964 = vst [vmem:[#allocation2 + $0x80] sm:$0xff] %v932
    %965 = vst [vmem:[#allocation2 + $0x88] sm:$0xff] %v933
    %966 = vst [vmem:[#allocation2 + $0x90] sm:$0xff] %v934
    %967 = vst [vmem:[#allocation2 + $0x98] sm:$0xff] %v935
    %968 = vst [vmem:[#allocation2 + $0xa0] sm:$0xff] %v936
    %969 = vst [vmem:[#allocation2 + $0xa8] sm:$0xff] %v937
    %970 = vst [vmem:[#allocation2 + $0xb0] sm:$0xff] %v938
    %971 = vst [vmem:[#allocation2 + $0xb8] sm:$0xff] %v939
    %972 = vst [vmem:[#allocation2 + $0xc0] sm:$0xff] %v940
    %973 = vst [vmem:[#allocation2 + $0xc8] sm:$0xff] %v941
    %974 = vst [vmem:[#allocation2 + $0xd0] sm:$0xff] %v942
    %975 = vst [vmem:[#allocation2 + $0xd8] sm:$0xff] %v943
    %976 = vst [vmem:[#allocation2 + $0xe0] sm:$0xff] %v944
    %977 = vst [vmem:[#allocation2 + $0xe8] sm:$0xff] %v945
    %978 = vst [vmem:[#allocation2 + $0xf0] sm:$0xff] %v946
    %979 = vst [vmem:[#allocation2 + $0xf8] sm:$0xff] %v947
    // Predicated region
    $region38: #{tpu_custom_call.1} parent=1 // pred_check
      _
    $region39: #{tpu_custom_call.1} parent=1 // pred_check_branch
      %981 = sbr.rel (0) target = $region41
    $region40: #{tpu_custom_call.1} parent=1 // pred_region
      %983 = vsyncadd [#allocation3], 0
      %s984 = sshll.u32 [#allocation2], 4
      %s985 = int_to_ptr.vmem [resolvable:$true] %s984
      %s986 = sshll.u32 %s9, 4
      %s987 = int_to_ptr.hbm [resolvable:$true] %s986
      %992 = dma.vmem_to_hbm [thread:$0]  %s985, 4096, %s987, [#allocation3], 256, 256, 16
    $region41: #{tpu_custom_call.1} parent=1 // pred_fallthru
      _
    // Predicated region
    $region42: #{tpu_custom_call.1} parent=1 // pred_check
      _
    $region43: #{tpu_custom_call.1} parent=1 // pred_check_branch
      %994 = sbr.rel (0) target = $region45
    $region44: #{tpu_custom_call.1} parent=1 // pred_region
      %996 = dma.done [#allocation3], 4096
    $region45: #{tpu_custom_call.1} parent=1 // pred_fallthru
      _
    %997 = vsyncpa [#allocation3], 1

</llo_original>
